<compile_context>
chip_gen: v5e
topology: v5e:2x2
jax: 0.10.0
libtpu: 0.0.40
codegen_flags: <defaults>
</compile_context>

<pallas_src>
import jax
import jax.numpy as jnp
from jax import lax
from jax.experimental import pallas as pl
from jax.experimental.pallas import tpu as pltpu

B = 2            # batch
L = 8            # encoder max length
H = 32           # hidden size
V = 64           # output vocab size
N_LAYERS = 2
H4 = 4 * H       # 128 == one vreg lane width
LANES = 128

# ---------------- bf16 weight slab row offsets (all 16-aligned for bf16 tiling) ----------
R_W0   = 0                 # (128,128) fused layer-0: rows[0:64]=w_ih0, rows[64:96]=w_hh0, rest 0
R_W1   = R_W0 + H4         # (64,128)  fused layer-1: rows[0:32]=w_ih1, rows[32:64]=w_hh1
R_WAT  = R_W1 + 2 * H      # (32,128)  cols[0:32] = w_attn^T   (q = rnn @ Wa^T)
R_WC   = R_WAT + H         # (64,128)  rows[0:32]=w_concat[:H], rows[32:64]=w_concat[H:], cols[0:32]
R_WOUT = R_WC + 2 * H      # (32,128)  cols[0:64] = w_out
W_ROWS = R_WOUT + H        # 320

# ---------------- f32 activation slab row offsets ----------------
A_XH0  = 0                 # rows[0:B]: [embedded | last_attn_vec | h0[0] | c0[0]]
A_HC1  = B                 # rows[B:2B]: [h0[1] | c0[1] | 0 | 0]
A_BIAS = 2 * B             # rows[2B:2B+4]: b0, b1, b_concat, b_out   (f32, g-gate cols of b0/b1 x2)
A_ENC  = 8                 # rows[8:8+B*L]: encoder_outputs.reshape(B*L, H) in cols[0:32]
A_ROWS = A_ENC + B * L     # 24
assert A_BIAS + 4 == A_ENC  # layout assumes B == 2

# ---------------- output slab: ONE (8,128) f32 vreg tile ----------------
# rows[0:B]  : lanes [0:64]=logits, [64:96]=concat_output, [96:112]=attn (B*L), rest 0
# rows[B:2B] : lanes [0:32]=h_new0, [32:64]=h_new1, [64:96]=c_new0, [96:128]=c_new1
O_ROWS = 8


def decoder_kernel(a_ref, w_ref, o_ref):
    # ---------------- activations + biases (one small f32 slab) ----------------
    xh0c = a_ref[A_XH0:A_XH0 + B, :]                  # (B,128)
    hc1 = a_ref[A_HC1:A_HC1 + B, :]                   # (B,128)
    b0 = a_ref[A_BIAS + 0:A_BIAS + 1, :]              # (1,128)  (g-gate cols pre-scaled x2)
    b1 = a_ref[A_BIAS + 1:A_BIAS + 2, :]
    bc = a_ref[A_BIAS + 2:A_BIAS + 3, :]
    bo = a_ref[A_BIAS + 3:A_BIAS + 4, :]
    enc2d = a_ref[A_ENC:A_ENC + B * L, :]             # (B*L,128), cols[0:H] valid, rest 0

    # ---------------- bf16 weight slab, upcast in-kernel; all accumulation f32 -------------
    w0 = w_ref[R_W0:R_W0 + H4, :].astype(jnp.float32)
    w1 = w_ref[R_W1:R_W1 + 2 * H, :].astype(jnp.float32)
    wat = w_ref[R_WAT:R_WAT + H, :].astype(jnp.float32)
    wc = w_ref[R_WC:R_WC + 2 * H, :].astype(jnp.float32)
    wout = w_ref[R_WOUT:R_WOUT + H, :].astype(jnp.float32)

    def gates_to_hc(gates, c_prev):
        # One full-width sigmoid over the (B, 4H)=(B,128) gate vreg.  g-gate pre-activations
        # were scaled by 2 in the packing, so tanh(g_orig) == 2*sigmoid(2*g_orig) - 1 exactly.
        act = 1.0 / (1.0 + jnp.exp(-gates))
        i = act[:, 0 * H:1 * H]
        f = act[:, 1 * H:2 * H]
        g = 2.0 * act[:, 2 * H:3 * H] - 1.0
        o = act[:, 3 * H:4 * H]
        c_new = f * c_prev + i * g
        h_new = o * jnp.tanh(c_new)
        return h_new, c_new

    # ---------------- 2-layer LSTM, seq_len == 1 (dropout = identity in eval mode) ---------
    # layer 0: [emb | attn_vec | h0[0] | c0[0]] @ W0  -- W0 rows 96:128 are zero, so the
    # c0[0] lanes piggy-backing in the LHS do not affect the gates.
    gates0 = jnp.dot(xh0c, w0, preferred_element_type=jnp.float32) + b0
    h_new0, c_new0 = gates_to_hc(gates0, xh0c[:, 3 * H:4 * H])

    # layer 1: single fused dot, LHS = [h_new0 | h0[1]]
    lhs1 = jnp.concatenate([h_new0, hc1[:, 0:H]], axis=1)            # (B, 2H)
    gates1 = jnp.dot(lhs1, w1, preferred_element_type=jnp.float32) + b1
    h_new1, c_new1 = gates_to_hc(gates1, hc1[:, H:2 * H])
    rnn_output = h_new1                                              # (B,H)

    # ---------------- attention (method == 'general'), on the MXU --------------------------
    # scores[b,l] = rnn[b] . (Wa enc[b,l])  ==  (rnn Wa^T) . enc[b,l];  the attn-Linear bias
    # adds a per-row constant to the scores -> cancels in the softmax, so it is omitted.
    q = jnp.dot(rnn_output, wat, preferred_element_type=jnp.float32)  # (B,128), cols[0:H]
    scores = lax.dot_general(q, enc2d, (((1,), (1,)), ((), ())),
                             preferred_element_type=jnp.float32)      # (B, B*L)
    row = lax.broadcasted_iota(jnp.int32, (B, B * L), 0)
    col = lax.broadcasted_iota(jnp.int32, (B, B * L), 1)
    d = col - row * L
    scores = jnp.where((d >= 0) & (d < L), scores, jnp.float32(-1e30))
    m = jnp.max(scores, axis=-1, keepdims=True)
    e = jnp.exp(scores - m)
    attn = e * pl.reciprocal(jnp.sum(e, axis=-1, keepdims=True), approx=True)  # (B, B*L)

    # context = attn bmm encoder_outputs (off-block weights are exactly 0)
    context = jnp.dot(attn, enc2d, preferred_element_type=jnp.float32)  # (B,128), cols[0:H]

    # ---------------- concat -> tanh(Linear) -> out Linear (fused LHS, no in-kernel concat W)
    lhs_c = jnp.concatenate([rnn_output, context[:, 0:H]], axis=1)     # (B, 2H)
    pre = jnp.dot(lhs_c, wc, preferred_element_type=jnp.float32)       # (B,128), cols[0:H]
    concat_hid = jnp.tanh(pre[:, 0:H] + bc[:, 0:H])                    # (B,H)
    logits = jnp.dot(concat_hid, wout, preferred_element_type=jnp.float32) + bo  # (B,128)

    # ---------------- ONE unmasked, fully lane/sublane-dense (8,128) store -----------------
    misc = jnp.concatenate(
        [logits[:, 0:V], concat_hid, attn,
         jnp.zeros((B, LANES - V - H - B * L), jnp.float32)], axis=1)   # (B,128)
    states = jnp.concatenate([h_new0, h_new1, c_new0, c_new1], axis=1)  # (B,128)
    o_ref[...] = jnp.concatenate(
        [misc, states, jnp.zeros((O_ROWS - 2 * B, LANES), jnp.float32)], axis=0)


def pack_params(params):
    """Pack weights once: (320,128) bf16 weight slab + (4,128) f32 bias rows."""
    def scale_g(w):   # pre-scale g-gate columns by 2: tanh(x) = 2*sigmoid(2x) - 1
        return w.at[..., 2 * H:3 * H].multiply(2.0)

    w = jnp.zeros((W_ROWS, LANES), jnp.float32)
    w = w.at[R_W0:R_W0 + 2 * H, :].set(scale_g(params["w_ih0"]))
    w = w.at[R_W0 + 2 * H:R_W0 + 3 * H, :].set(scale_g(params["w_hh0"]))
    w = w.at[R_W1:R_W1 + H, :].set(scale_g(params["w_ih1"]))
    w = w.at[R_W1 + H:R_W1 + 2 * H, :].set(scale_g(params["w_hh1"]))
    w = w.at[R_WAT:R_WAT + H, 0:H].set(params["w_attn"].T)
    w = w.at[R_WC:R_WC + H, 0:H].set(params["w_concat"][0:H])
    w = w.at[R_WC + H:R_WC + 2 * H, 0:H].set(params["w_concat"][H:2 * H])
    w = w.at[R_WOUT:R_WOUT + H, 0:V].set(params["w_out"])
    w_slab = w.astype(jnp.bfloat16)          # matrices bf16; biases stay f32 below

    bias = jnp.zeros((4, LANES), jnp.float32)
    bias = bias.at[0, :].set(scale_g(params["b0"])[0])
    bias = bias.at[1, :].set(scale_g(params["b1"])[0])
    bias = bias.at[2, 0:H].set(params["b_concat"][0])
    bias = bias.at[3, 0:V].set(params["b_out"][0])
    # b_attn deliberately not packed: softmax-invariant (see kernel comment).
    return w_slab, bias


def lstm_attn_decoder_forward(input_seq, last_hidden, encoder_outputs, last_attn_vector,
                              embedding, w_slab, bias_rows):
    """Mirrors LSTMAttnDecoderRNN.forward (attention_override=None, eval mode)."""
    h0, c0 = last_hidden
    embedded = embedding[input_seq]                                    # (B,H) gather (wrapper glue)

    # one small lane-dense f32 activation slab (activations + f32 biases) -> one input DMA
    xh0c = jnp.concatenate([embedded, last_attn_vector, h0[0], c0[0]], axis=1)          # (B,128)
    hc1 = jnp.concatenate([h0[1], c0[1],
                           jnp.zeros((B, LANES - 2 * H), jnp.float32)], axis=1)          # (B,128)
    enc = jnp.pad(encoder_outputs.reshape(B * L, H).astype(jnp.float32),
                  ((0, 0), (0, LANES - H)))                                              # (B*L,128)
    a = jnp.concatenate([xh0c, hc1, bias_rows, enc], axis=0)                             # (24,128)

    flops = 2 * B * LANES * (H4 + 2 * H + H + B * L + B * L + 2 * H + H)
    ce = pl.CostEstimate(flops=flops,
                         transcendentals=2 * B * H4 + 3 * B * H + B * B * L,
                         bytes_accessed=4 * A_ROWS * LANES + 2 * W_ROWS * LANES
                         + 4 * O_ROWS * LANES)

    vmem = pl.BlockSpec(memory_space=pltpu.MemorySpace.VMEM)
    out = pl.pallas_call(
        decoder_kernel,
        out_shape=jax.ShapeDtypeStruct((O_ROWS, LANES), jnp.float32),
        in_specs=[vmem, vmem],
        out_specs=vmem,
        cost_estimate=ce,
    )(a, w_slab)

    output = out[0:B, 0:V]
    concat_output = out[0:B, V:V + H]
    attn_blocks = out[0:B, V + H:V + H + B * L].reshape(B, B, L)
    attn_weights = attn_blocks[jnp.arange(B), jnp.arange(B), :].reshape(B, 1, L)
    h_n = jnp.stack([out[B:2 * B, 0:H], out[B:2 * B, H:2 * H]])
    c_n = jnp.stack([out[B:2 * B, 2 * H:3 * H], out[B:2 * B, 3 * H:4 * H]])
    return output, (h_n, c_n), attn_weights, concat_output


def reference_forward(input_seq, last_hidden, encoder_outputs, last_attn_vector, params):
    """Pure-JAX f32 reference of the same math (correctness check)."""
    h0, c0 = last_hidden
    embedded = params["embedding"][input_seq]
    x = jnp.concatenate([embedded, last_attn_vector], axis=1)

    def cell(xin, h, c, wih, whh, b):
        g = xin @ wih + h @ whh + b
        i, f, gg, o = (jax.nn.sigmoid(g[:, :H]), jax.nn.sigmoid(g[:, H:2 * H]),
                       jnp.tanh(g[:, 2 * H:3 * H]), jax.nn.sigmoid(g[:, 3 * H:]))
        cn = f * c + i * gg
        return o * jnp.tanh(cn), cn

    h_0, c_0 = cell(x, h0[0], c0[0], params["w_ih0"], params["w_hh0"], params["b0"][0])
    h_1, c_1 = cell(h_0, h0[1], c0[1], params["w_ih1"], params["w_hh1"], params["b1"][0])
    rnn_output = h_1
    energy = encoder_outputs @ params["w_attn"] + params["b_attn"][0]
    scores = jnp.einsum("bh,blh->bl", rnn_output, energy)
    attn_w = jax.nn.softmax(scores, axis=1)
    context = jnp.einsum("bl,blh->bh", attn_w, encoder_outputs)
    concat_output = jnp.tanh(jnp.concatenate([rnn_output, context], 1) @ params["w_concat"]
                             + params["b_concat"][0])
    output = concat_output @ params["w_out"] + params["b_out"][0]
    return (output, (jnp.stack([h_0, h_1]), jnp.stack([c_0, c_1])),
            attn_w.reshape(B, 1, L), concat_output)


def _init_params(key):
    ks = jax.random.split(key, 16)
    u = lambda k, shape, s=0.1: jax.random.uniform(k, shape, jnp.float32, -s, s)
    return {
        "embedding": u(ks[0], (V, H)),
        # LSTM layer 0: input size 2H, pre-transposed (in, 4H), gate order (i,f,g,o)
        "w_ih0": u(ks[1], (2 * H, 4 * H)),
        "w_hh0": u(ks[2], (H, 4 * H)),
        "b0":    u(ks[3], (1, 4 * H)),
        # LSTM layer 1: input size H
        "w_ih1": u(ks[4], (H, 4 * H)),
        "w_hh1": u(ks[5], (H, 4 * H)),
        "b1":    u(ks[6], (1, 4 * H)),
        # Attn 'general' Linear(H -> H)
        "w_attn": u(ks[7], (H, H)),
        "b_attn": u(ks[8], (1, H)),
        # concat Linear(2H -> H)
        "w_concat": u(ks[9], (2 * H, H)),
        "b_concat": u(ks[10], (1, H)),
        # out Linear(H -> V)
        "w_out": u(ks[11], (H, V)),
        "b_out": u(ks[12], (1, V)),
    }


if __name__ == "__main__":
    key = jax.random.PRNGKey(0)
    kp, k1, k2, k3, k4, k5 = jax.random.split(key, 6)
    params = _init_params(kp)
    w_slab, bias_rows = pack_params(params)      # packed ONCE, reused across decode steps

    input_seq = jax.random.randint(k1, (B,), 0, V, dtype=jnp.int32)
    h0 = jax.random.normal(k2, (N_LAYERS, B, H), jnp.float32) * 0.1
    c0 = jax.random.normal(k3, (N_LAYERS, B, H), jnp.float32) * 0.1
    encoder_outputs = jax.random.normal(k4, (B, L, H), jnp.float32) * 0.1
    last_attn_vector = jax.random.normal(k5, (B, H), jnp.float32) * 0.1

    fwd = jax.jit(lstm_attn_decoder_forward)
    output, (h_n, c_n), attn_weights, concat_output = fwd(
        input_seq, (h0, c0), encoder_outputs, last_attn_vector,
        params["embedding"], w_slab, bias_rows)
    jax.block_until_ready((output, h_n, c_n, attn_weights, concat_output))

    # correctness check vs pure-JAX f32 reference (bf16 weight quantisation stays well
    # inside this budget at these magnitudes; biases and all accumulation are f32)
    r_out, (r_hn, r_cn), r_attn, r_cat = reference_forward(
        input_seq, (h0, c0), encoder_outputs, last_attn_vector, params)
    assert jnp.allclose(output, r_out, atol=1e-3, rtol=1e-3)
    assert jnp.allclose(h_n, r_hn, atol=1e-3, rtol=1e-3)
    assert jnp.allclose(c_n, r_cn, atol=1e-3, rtol=1e-3)
    assert jnp.allclose(attn_weights, r_attn, atol=1e-3, rtol=1e-3)
    assert jnp.allclose(concat_output, r_cat, atol=1e-3, rtol=1e-3)

    print("KERNEL_OK")
</pallas_src>

<mosaic_0001>
module attributes {stable_mosaic.version = 11 : i64} {
  func.func @decoder_kernel(%arg0: memref<24x128xf32, #tpu.memory_space<vmem>>, %arg1: memref<320x128xbf16, #tpu.memory_space<vmem>>, %arg2: memref<8x128xf32, #tpu.memory_space<vmem>>) attributes {dimension_semantics = [], scalar_prefetch = 0 : i64, scratch_operands = 0 : i64, tpu.core_type = #tpu.core_type<tc>} {
    %c0 = arith.constant 0 : index
    %c0_0 = arith.constant 0 : index
    %0 = vector.load %arg0[%c0, %c0_0] : memref<24x128xf32, #tpu.memory_space<vmem>>, vector<2x128xf32>
    %c2 = arith.constant 2 : index
    %c0_1 = arith.constant 0 : index
    %1 = vector.load %arg0[%c2, %c0_1] : memref<24x128xf32, #tpu.memory_space<vmem>>, vector<2x128xf32>
    %c4 = arith.constant 4 : index
    %c0_2 = arith.constant 0 : index
    %2 = vector.load %arg0[%c4, %c0_2] : memref<24x128xf32, #tpu.memory_space<vmem>>, vector<1x128xf32>
    %c5 = arith.constant 5 : index
    %c0_3 = arith.constant 0 : index
    %3 = vector.load %arg0[%c5, %c0_3] : memref<24x128xf32, #tpu.memory_space<vmem>>, vector<1x128xf32>
    %c6 = arith.constant 6 : index
    %c0_4 = arith.constant 0 : index
    %4 = vector.load %arg0[%c6, %c0_4] : memref<24x128xf32, #tpu.memory_space<vmem>>, vector<1x128xf32>
    %c7 = arith.constant 7 : index
    %c0_5 = arith.constant 0 : index
    %5 = vector.load %arg0[%c7, %c0_5] : memref<24x128xf32, #tpu.memory_space<vmem>>, vector<1x128xf32>
    %c8 = arith.constant 8 : index
    %c0_6 = arith.constant 0 : index
    %6 = vector.load %arg0[%c8, %c0_6] : memref<24x128xf32, #tpu.memory_space<vmem>>, vector<16x128xf32>
    %c0_7 = arith.constant 0 : index
    %c0_8 = arith.constant 0 : index
    %7 = vector.load %arg1[%c0_7, %c0_8] : memref<320x128xbf16, #tpu.memory_space<vmem>>, vector<128x128xbf16>
    %8 = arith.extf %7 : vector<128x128xbf16> to vector<128x128xf32>
    %c128 = arith.constant 128 : index
    %c0_9 = arith.constant 0 : index
    %9 = vector.load %arg1[%c128, %c0_9] : memref<320x128xbf16, #tpu.memory_space<vmem>>, vector<64x128xbf16>
    %10 = arith.extf %9 : vector<64x128xbf16> to vector<64x128xf32>
    %c192 = arith.constant 192 : index
    %c0_10 = arith.constant 0 : index
    %11 = vector.load %arg1[%c192, %c0_10] : memref<320x128xbf16, #tpu.memory_space<vmem>>, vector<32x128xbf16>
    %12 = arith.extf %11 : vector<32x128xbf16> to vector<32x128xf32>
    %c224 = arith.constant 224 : index
    %c0_11 = arith.constant 0 : index
    %13 = vector.load %arg1[%c224, %c0_11] : memref<320x128xbf16, #tpu.memory_space<vmem>>, vector<64x128xbf16>
    %14 = arith.extf %13 : vector<64x128xbf16> to vector<64x128xf32>
    %c288 = arith.constant 288 : index
    %c0_12 = arith.constant 0 : index
    %15 = vector.load %arg1[%c288, %c0_12] : memref<320x128xbf16, #tpu.memory_space<vmem>>, vector<32x128xbf16>
    %16 = arith.extf %15 : vector<32x128xbf16> to vector<32x128xf32>
    %cst = arith.constant dense<0.000000e+00> : vector<2x128xf32>
    %17 = tpu.matmul %0, %8, %cst {dimension_numbers = #tpu.dot_dimension_numbers<[1], [0], [0], [1], [0, 0, 1, 1], [], []>} : vector<2x128xf32>, vector<128x128xf32>, vector<2x128xf32> -> vector<2x128xf32>
    %18 = vector.broadcast %2 : vector<1x128xf32> to vector<2x128xf32>
    %19 = arith.addf %17, %18 : vector<2x128xf32>
    %20 = vector.extract_strided_slice %0 {offsets = [0, 96], sizes = [2, 32], strides = [1, 1]} : vector<2x128xf32> to vector<2x32xf32>
    %cst_13 = arith.constant 0.000000e+00 : f32
    %21 = vector.broadcast %cst_13 : f32 to vector<2x128xf32>
    %22 = arith.subf %21, %19 : vector<2x128xf32>
    %23 = math.exp %22 : vector<2x128xf32>
    %cst_14 = arith.constant 1.000000e+00 : f32
    %24 = vector.broadcast %cst_14 : f32 to vector<2x128xf32>
    %25 = arith.addf %24, %23 : vector<2x128xf32>
    %cst_15 = arith.constant 1.000000e+00 : f32
    %26 = vector.broadcast %cst_15 : f32 to vector<2x128xf32>
    %27 = arith.divf %26, %25 : vector<2x128xf32>
    %28 = vector.extract_strided_slice %27 {offsets = [0, 0], sizes = [2, 32], strides = [1, 1]} : vector<2x128xf32> to vector<2x32xf32>
    %29 = vector.extract_strided_slice %27 {offsets = [0, 32], sizes = [2, 32], strides = [1, 1]} : vector<2x128xf32> to vector<2x32xf32>
    %30 = vector.extract_strided_slice %27 {offsets = [0, 64], sizes = [2, 32], strides = [1, 1]} : vector<2x128xf32> to vector<2x32xf32>
    %cst_16 = arith.constant 2.000000e+00 : f32
    %31 = vector.broadcast %cst_16 : f32 to vector<2x32xf32>
    %32 = arith.mulf %31, %30 : vector<2x32xf32>
    %cst_17 = arith.constant 1.000000e+00 : f32
    %33 = vector.broadcast %cst_17 : f32 to vector<2x32xf32>
    %34 = arith.subf %32, %33 : vector<2x32xf32>
    %35 = vector.extract_strided_slice %27 {offsets = [0, 96], sizes = [2, 32], strides = [1, 1]} : vector<2x128xf32> to vector<2x32xf32>
    %36 = arith.mulf %29, %20 : vector<2x32xf32>
    %37 = arith.mulf %28, %34 : vector<2x32xf32>
    %38 = arith.addf %36, %37 : vector<2x32xf32>
    %39 = math.tanh %38 : vector<2x32xf32>
    %40 = arith.mulf %35, %39 : vector<2x32xf32>
    %41 = vector.extract_strided_slice %1 {offsets = [0, 0], sizes = [2, 32], strides = [1, 1]} : vector<2x128xf32> to vector<2x32xf32>
    %42 = tpu.concatenate %40, %41 in 1 : vector<2x32xf32>, vector<2x32xf32> -> vector<2x64xf32>
    %cst_18 = arith.constant dense<0.000000e+00> : vector<2x128xf32>
    %43 = tpu.matmul %42, %10, %cst_18 {dimension_numbers = #tpu.dot_dimension_numbers<[1], [0], [0], [1], [0, 0, 1, 1], [], []>} : vector<2x64xf32>, vector<64x128xf32>, vector<2x128xf32> -> vector<2x128xf32>
    %44 = vector.broadcast %3 : vector<1x128xf32> to vector<2x128xf32>
    %45 = arith.addf %43, %44 : vector<2x128xf32>
    %46 = vector.extract_strided_slice %1 {offsets = [0, 32], sizes = [2, 32], strides = [1, 1]} : vector<2x128xf32> to vector<2x32xf32>
    %cst_19 = arith.constant 0.000000e+00 : f32
    %47 = vector.broadcast %cst_19 : f32 to vector<2x128xf32>
    %48 = arith.subf %47, %45 : vector<2x128xf32>
    %49 = math.exp %48 : vector<2x128xf32>
    %cst_20 = arith.constant 1.000000e+00 : f32
    %50 = vector.broadcast %cst_20 : f32 to vector<2x128xf32>
    %51 = arith.addf %50, %49 : vector<2x128xf32>
    %cst_21 = arith.constant 1.000000e+00 : f32
    %52 = vector.broadcast %cst_21 : f32 to vector<2x128xf32>
    %53 = arith.divf %52, %51 : vector<2x128xf32>
    %54 = vector.extract_strided_slice %53 {offsets = [0, 0], sizes = [2, 32], strides = [1, 1]} : vector<2x128xf32> to vector<2x32xf32>
    %55 = vector.extract_strided_slice %53 {offsets = [0, 32], sizes = [2, 32], strides = [1, 1]} : vector<2x128xf32> to vector<2x32xf32>
    %56 = vector.extract_strided_slice %53 {offsets = [0, 64], sizes = [2, 32], strides = [1, 1]} : vector<2x128xf32> to vector<2x32xf32>
    %cst_22 = arith.constant 2.000000e+00 : f32
    %57 = vector.broadcast %cst_22 : f32 to vector<2x32xf32>
    %58 = arith.mulf %57, %56 : vector<2x32xf32>
    %cst_23 = arith.constant 1.000000e+00 : f32
    %59 = vector.broadcast %cst_23 : f32 to vector<2x32xf32>
    %60 = arith.subf %58, %59 : vector<2x32xf32>
    %61 = vector.extract_strided_slice %53 {offsets = [0, 96], sizes = [2, 32], strides = [1, 1]} : vector<2x128xf32> to vector<2x32xf32>
    %62 = arith.mulf %55, %46 : vector<2x32xf32>
    %63 = arith.mulf %54, %60 : vector<2x32xf32>
    %64 = arith.addf %62, %63 : vector<2x32xf32>
    %65 = math.tanh %64 : vector<2x32xf32>
    %66 = arith.mulf %61, %65 : vector<2x32xf32>
    %cst_24 = arith.constant dense<0.000000e+00> : vector<2x128xf32>
    %67 = tpu.matmul %66, %12, %cst_24 {dimension_numbers = #tpu.dot_dimension_numbers<[1], [0], [0], [1], [0, 0, 1, 1], [], []>} : vector<2x32xf32>, vector<32x128xf32>, vector<2x128xf32> -> vector<2x128xf32>
    %cst_25 = arith.constant dense<0.000000e+00> : vector<2x16xf32>
    %68 = tpu.matmul %67, %6, %cst_25 {dimension_numbers = #tpu.dot_dimension_numbers<[1], [1], [0], [0], [0, 0, 1, 0], [], []>} : vector<2x128xf32>, vector<16x128xf32>, vector<2x16xf32> -> vector<2x16xf32>
    %69 = tpu.iota {dimensions = array<i32: 0>} : vector<2x16xi32>
    %70 = tpu.iota {dimensions = array<i32: 1>} : vector<2x16xi32>
    %c8_i32 = arith.constant 8 : i32
    %71 = vector.broadcast %c8_i32 : i32 to vector<2x16xi32>
    %72 = arith.muli %69, %71 : vector<2x16xi32>
    %73 = arith.subi %70, %72 : vector<2x16xi32>
    %c0_i32 = arith.constant 0 : i32
    %74 = vector.broadcast %c0_i32 : i32 to vector<2x16xi32>
    %75 = arith.cmpi sge, %73, %74 : vector<2x16xi32>
    %c8_i32_26 = arith.constant 8 : i32
    %76 = vector.broadcast %c8_i32_26 : i32 to vector<2x16xi32>
    %77 = arith.cmpi slt, %73, %76 : vector<2x16xi32>
    %78 = arith.andi %75, %77 : vector<2x16xi1>
    %cst_27 = arith.constant -1.000000e+30 : f32
    %79 = vector.broadcast %cst_27 : f32 to vector<2x16xf32>
    %80 = arith.select %78, %68, %79 : vector<2x16xi1>, vector<2x16xf32>
    %cst_28 = arith.constant dense<0xFF800000> : vector<2xf32>
    %81 = vector.multi_reduction <maximumf>, %80, %cst_28 [1] : vector<2x16xf32> to vector<2xf32>
    %82 = vector.shape_cast %81 : vector<2xf32> to vector<2x1xf32>
    %83 = vector.broadcast %82 : vector<2x1xf32> to vector<2x16xf32>
    %84 = arith.subf %80, %83 : vector<2x16xf32>
    %85 = math.exp %84 : vector<2x16xf32>
    %cst_29 = arith.constant dense<0.000000e+00> : vector<2xf32>
    %86 = vector.multi_reduction <add>, %85, %cst_29 [1] : vector<2x16xf32> to vector<2xf32>
    %87 = vector.shape_cast %86 : vector<2xf32> to vector<2x1xf32>
    %88 = tpu.reciprocal %87 {approx = true} : vector<2x1xf32> -> vector<2x1xf32>
    %89 = vector.broadcast %88 : vector<2x1xf32> to vector<2x16xf32>
    %90 = arith.mulf %85, %89 : vector<2x16xf32>
    %cst_30 = arith.constant dense<0.000000e+00> : vector<2x128xf32>
    %91 = tpu.matmul %90, %6, %cst_30 {dimension_numbers = #tpu.dot_dimension_numbers<[1], [0], [0], [1], [0, 0, 1, 1], [], []>} : vector<2x16xf32>, vector<16x128xf32>, vector<2x128xf32> -> vector<2x128xf32>
    %92 = vector.extract_strided_slice %91 {offsets = [0, 0], sizes = [2, 32], strides = [1, 1]} : vector<2x128xf32> to vector<2x32xf32>
    %93 = tpu.concatenate %66, %92 in 1 : vector<2x32xf32>, vector<2x32xf32> -> vector<2x64xf32>
    %cst_31 = arith.constant dense<0.000000e+00> : vector<2x128xf32>
    %94 = tpu.matmul %93, %14, %cst_31 {dimension_numbers = #tpu.dot_dimension_numbers<[1], [0], [0], [1], [0, 0, 1, 1], [], []>} : vector<2x64xf32>, vector<64x128xf32>, vector<2x128xf32> -> vector<2x128xf32>
    %95 = vector.extract_strided_slice %94 {offsets = [0, 0], sizes = [2, 32], strides = [1, 1]} : vector<2x128xf32> to vector<2x32xf32>
    %96 = vector.extract_strided_slice %4 {offsets = [0, 0], sizes = [1, 32], strides = [1, 1]} : vector<1x128xf32> to vector<1x32xf32>
    %97 = vector.broadcast %96 : vector<1x32xf32> to vector<2x32xf32>
    %98 = arith.addf %95, %97 : vector<2x32xf32>
    %99 = math.tanh %98 : vector<2x32xf32>
    %cst_32 = arith.constant dense<0.000000e+00> : vector<2x128xf32>
    %100 = tpu.matmul %99, %16, %cst_32 {dimension_numbers = #tpu.dot_dimension_numbers<[1], [0], [0], [1], [0, 0, 1, 1], [], []>} : vector<2x32xf32>, vector<32x128xf32>, vector<2x128xf32> -> vector<2x128xf32>
    %101 = vector.broadcast %5 : vector<1x128xf32> to vector<2x128xf32>
    %102 = arith.addf %100, %101 : vector<2x128xf32>
    %103 = vector.extract_strided_slice %102 {offsets = [0, 0], sizes = [2, 64], strides = [1, 1]} : vector<2x128xf32> to vector<2x64xf32>
    %cst_33 = arith.constant 0.000000e+00 : f32
    %104 = vector.broadcast %cst_33 : f32 to vector<2x16xf32>
    %105 = tpu.concatenate %103, %99, %90, %104 in 1 : vector<2x64xf32>, vector<2x32xf32>, vector<2x16xf32>, vector<2x16xf32> -> vector<2x128xf32>
    %106 = tpu.concatenate %40, %66, %38, %64 in 1 : vector<2x32xf32>, vector<2x32xf32>, vector<2x32xf32>, vector<2x32xf32> -> vector<2x128xf32>
    %cst_34 = arith.constant 0.000000e+00 : f32
    %107 = vector.broadcast %cst_34 : f32 to vector<4x128xf32>
    %108 = tpu.concatenate %105, %106, %107 in 0 : vector<2x128xf32>, vector<2x128xf32>, vector<4x128xf32> -> vector<8x128xf32>
    %c0_35 = arith.constant 0 : index
    %c0_36 = arith.constant 0 : index
    %109 = vector.load %arg2[%c0_35, %c0_36] : memref<8x128xf32, #tpu.memory_space<vmem>>, vector<8x128xf32>
    tpu.vector_store %arg2[%c0_35, %c0_36], %108 {strides = array<i32>} : memref<8x128xf32, #tpu.memory_space<vmem>>, vector<8x128xf32>,
    return
  }
}

</mosaic_0001>

<llo_original>
// kernel: lstm_attn_decoder_forward.1
$region0: #{lstm_attn_decoder_forward.1}
  #allocation0 [shape = 'u32[]', space=smem, size = 0x4, offset = 0x4, fixed_abs, tag = 'smem constant byte address 0x4 - core index']
  #allocation1 [shape = 'u32[72,128]{1,0:T(1,128)}', space=vmem, size = 0x9000, scoped, tag = 'internal scratch']
  %s0 = inlined_call_operand.vmem [shape: f32[24,128], index: 0, kind: input, shape index: {}]
  %s1 = inlined_call_operand.vmem [shape: bf16[320,128], index: 1, kind: input, shape index: {}]
  %s2 = inlined_call_operand.vmem [shape: f32[8,128], index: 2, kind: output, shape index: {}]
  %s3 = sld [smem:[#allocation0]]
  $region18: #{lstm_attn_decoder_forward.1} parent=0
    _
  %s5 = ssub.s32 1, %s3
  %s6 = scalar_select 0, %s5, %s3
  // Predicated region
  $region2: #{lstm_attn_decoder_forward.1} parent=0 // pred_check
    _
  $region3: #{lstm_attn_decoder_forward.1} parent=0 // pred_check_branch
    %8 = sbr.rel (0) target = $region5
  $region4: #{lstm_attn_decoder_forward.1} parent=0 // pred_region
    _
  $region5: #{lstm_attn_decoder_forward.1} parent=0 // pred_fallthru
    _
  // Predicated region
  $region6: #{lstm_attn_decoder_forward.1} parent=0 // pred_check
    _
  $region7: #{lstm_attn_decoder_forward.1} parent=0 // pred_check_branch
    %10 = sbr.rel (0) target = $region9
  $region8: #{lstm_attn_decoder_forward.1} parent=0 // pred_region
    _
  $region9: #{lstm_attn_decoder_forward.1} parent=0 // pred_fallthru
    _
  %v11 = vld [vmem:[%s0] sm:$0x3]
  %v12 = vld [vmem:[%s0 + $0x2] sm:$0x3]
  %v13 = vld [vmem:[%s0 + $0x4] sm:$0x1]
  %v14 = vld [vmem:[%s0 + $0x5] sm:$0x1]
  %v15 = vld [vmem:[%s0 + $0x6] sm:$0x1]
  %v16 = vld [vmem:[%s0 + $0x7] sm:$0x1]
  %v17 = vld [vmem:[%s0 + $0x8] sm:$0xff]
  %v18 = vld [vmem:[%s0 + $0x10] sm:$0xff]
  %v19 = vld [vmem:[%s1] sm:$0xf]
  %v20 = vld [vmem:[%s1 + $0x4] sm:$0xf]
  %v21 = vld [vmem:[%s1 + $0x8] sm:$0xf]
  %v22 = vld [vmem:[%s1 + $0xc] sm:$0xf]
  %v23 = vld [vmem:[%s1 + $0x10] sm:$0xf]
  %v24 = vld [vmem:[%s1 + $0x14] sm:$0xf]
  %v25 = vld [vmem:[%s1 + $0x18] sm:$0xf]
  %v26 = vld [vmem:[%s1 + $0x1c] sm:$0xf]
  %v27 = vld [vmem:[%s1 + $0x20] sm:$0xf]
  %v28 = vld [vmem:[%s1 + $0x24] sm:$0xf]
  %v29 = vld [vmem:[%s1 + $0x28] sm:$0xf]
  %v30 = vld [vmem:[%s1 + $0x2c] sm:$0xf]
  %v31 = vld [vmem:[%s1 + $0x30] sm:$0xf]
  %v32 = vld [vmem:[%s1 + $0x34] sm:$0xf]
  %v33 = vld [vmem:[%s1 + $0x38] sm:$0xf]
  %v34 = vld [vmem:[%s1 + $0x3c] sm:$0xf]
  %v35 = vunpack.c.l.bf16 %v19
  %v36 = vunpack.c.l.bf16 %v20
  %v37 = vunpack.c.l.bf16 %v21
  %v38 = vunpack.c.l.bf16 %v22
  %v39 = vunpack.c.l.bf16 %v23
  %v40 = vunpack.c.l.bf16 %v24
  %v41 = vunpack.c.l.bf16 %v25
  %v42 = vunpack.c.l.bf16 %v26
  %v43 = vunpack.c.l.bf16 %v27
  %v44 = vunpack.c.l.bf16 %v28
  %v45 = vunpack.c.l.bf16 %v29
  %v46 = vunpack.c.l.bf16 %v30
  %v47 = vunpack.c.l.bf16 %v31
  %v48 = vunpack.c.l.bf16 %v32
  %v49 = vunpack.c.l.bf16 %v33
  %v50 = vunpack.c.l.bf16 %v34
  %v51 = vld [vmem:[%s1 + $0x40] sm:$0xf]
  %v52 = vld [vmem:[%s1 + $0x44] sm:$0xf]
  %v53 = vld [vmem:[%s1 + $0x48] sm:$0xf]
  %v54 = vld [vmem:[%s1 + $0x4c] sm:$0xf]
  %v55 = vld [vmem:[%s1 + $0x50] sm:$0xf]
  %v56 = vld [vmem:[%s1 + $0x54] sm:$0xf]
  %v57 = vld [vmem:[%s1 + $0x58] sm:$0xf]
  %v58 = vld [vmem:[%s1 + $0x5c] sm:$0xf]
  %v59 = vunpack.c.l.bf16 %v51
  %v60 = vunpack.c.l.bf16 %v52
  %v61 = vunpack.c.l.bf16 %v53
  %v62 = vunpack.c.l.bf16 %v54
  %v63 = vunpack.c.l.bf16 %v55
  %v64 = vunpack.c.l.bf16 %v56
  %v65 = vunpack.c.l.bf16 %v57
  %v66 = vunpack.c.l.bf16 %v58
  %v67 = vld [vmem:[%s1 + $0x60] sm:$0xf]
  %v68 = vld [vmem:[%s1 + $0x64] sm:$0xf]
  %v69 = vld [vmem:[%s1 + $0x68] sm:$0xf]
  %v70 = vld [vmem:[%s1 + $0x6c] sm:$0xf]
  %v71 = vunpack.c.l.bf16 %v67
  %v72 = vunpack.c.l.bf16 %v68
  %v73 = vunpack.c.l.bf16 %v69
  %v74 = vunpack.c.l.bf16 %v70
  %v75 = vld [vmem:[%s1 + $0x70] sm:$0xf]
  %v76 = vld [vmem:[%s1 + $0x74] sm:$0xf]
  %v77 = vld [vmem:[%s1 + $0x78] sm:$0xf]
  %v78 = vld [vmem:[%s1 + $0x7c] sm:$0xf]
  %v79 = vld [vmem:[%s1 + $0x80] sm:$0xf]
  %v80 = vld [vmem:[%s1 + $0x84] sm:$0xf]
  %v81 = vld [vmem:[%s1 + $0x88] sm:$0xf]
  %v82 = vld [vmem:[%s1 + $0x8c] sm:$0xf]
  %v83 = vunpack.c.l.bf16 %v75
  %v84 = vunpack.c.l.bf16 %v76
  %v85 = vunpack.c.l.bf16 %v77
  %v86 = vunpack.c.l.bf16 %v78
  %v87 = vunpack.c.l.bf16 %v79
  %v88 = vunpack.c.l.bf16 %v80
  %v89 = vunpack.c.l.bf16 %v81
  %v90 = vunpack.c.l.bf16 %v82
  %v91 = vld [vmem:[%s1 + $0x90] sm:$0xf]
  %v92 = vld [vmem:[%s1 + $0x94] sm:$0xf]
  %v93 = vld [vmem:[%s1 + $0x98] sm:$0xf]
  %v94 = vld [vmem:[%s1 + $0x9c] sm:$0xf]
  %v95 = vunpack.c.l.bf16 %v91
  %v96 = vunpack.c.l.bf16 %v92
  %v97 = vunpack.c.l.bf16 %v93
  %v98 = vunpack.c.l.bf16 %v94
  %v99 = vperm.slane %v13, 0
  %100 = vmatpush.msra.mxu0 %v50
  %101 = vmatpush.msra.mxu0 %v49
  %102 = vmatpush.msra.mxu0 %v48
  %103 = vmatpush.msra.mxu0 %v47
  %104 = vmatpush.msra.mxu0 %v46
  %105 = vmatpush.msra.mxu0 %v45
  %106 = vmatpush.msra.mxu0 %v44
  %107 = vmatpush.msra.mxu0 %v43
  %108 = vmatpush.msra.mxu0 %v42
  %109 = vmatpush.msra.mxu0 %v41
  %110 = vmatpush.msra.mxu0 %v40
  %111 = vmatpush.msra.mxu0 %v39
  %112 = vmatpush.msra.mxu0 %v38
  %113 = vmatpush.msra.mxu0 %v37
  %114 = vmatpush.msra.mxu0 %v36
  %115 = vmatpush.msra.mxu0 %v35
  %116 = vmatmul.f32.gmra.mxu0 %v11
  %v117 = vpop.f32.mrf.mxu0
  %v118 = vadd.f32 %v99, %v117
  %119 = vdwg.mxu0
  %v120 = vsub.f32 0.0, %v118
  %v121 = vmul.f32 %v120, 1.442695
  %v122 = vpow.pop %v121
  %v123 = vadd.f32 %v122, 1.0
  %v124 = vrcp.pop %v123
  %v125 = vmul.f32 %v123, %v124
  %v126 = vsub.f32 1.0, %v125
  %v127 = vmul.f32 %v124, %v126
  %v128 = vadd.f32 %v124, %v127
  %vm129 = vweird.f32 %v123
  %vm130 = vweird.f32 %v124
  %vm131 = vmor %vm129, %vm130
  %v132 = vsel %vm131, %v124, %v128
  %v133 = vand.u32 2147483647, %v123
  %vm134 = vcmp.eq.f32.partialorder %v133, 8.507059e+37
  %v135 = vand.u32 %v123, 2147483648
  %v136 = vor.u32 1.1754944e-38, %v135
  %v137 = vsel %vm134, %v136, %v132
  %v138 = vmul.f32 1.0, %v137
  %v139 = vmul.f32 %v138, 2.0
  %v140 = vsub.f32 %v139, 1.0
  %142 = vrot.lane.b32.xlu0 %v11, 64
  %v143 = vpop.permute.xlu0 %142
  %v145 = vmul.f32 %v138, %v143
  %147 = vrot.lane.b32.xlu0 %v140, 64
  %v148 = vpop.permute.xlu0 %147
  %v150 = vmul.f32 %v138, %v148
  %152 = vrot.lane.b32.xlu0 %v150, 32
  %v153 = vpop.permute.xlu0 %152
  %v155 = vadd.f32 %v145, %v153
  %v156 = vtanh.pop %v155
  %158 = vrot.lane.b32.xlu0 %v156, 64
  %v159 = vpop.permute.xlu0 %158
  %v161 = vmul.f32 %v138, %v159
  %163 = vrot.lane.b32.xlu0 %v161, 32
  %v164 = vpop.permute.xlu0 %163
  %167 = vrot.lane.b32.xlu0 %v12, 32
  %v168 = vpop.permute.xlu0 %167
  %vm170 = vcmask 261120
  %v171 = vsel %vm170, %v164, %v168
  %v172 = vperm.slane %v14, 0
  %vm173 = vcmask 523264
  %v175 = vsel %vm173, %v171, 0
  %177 = vmatpush.msra.mxu0 0.0
  %178 = vmatpush.msra.mxu0 0.0
  %179 = vmatpush.msra.mxu0 0.0
  %180 = vmatpush.msra.mxu0 0.0
  %181 = vmatpush.msra.mxu0 0.0
  %182 = vmatpush.msra.mxu0 0.0
  %183 = vmatpush.msra.mxu0 0.0
  %184 = vmatpush.msra.mxu0 0.0
  %185 = vmatpush.msra.mxu0 %v66
  %186 = vmatpush.msra.mxu0 %v65
  %187 = vmatpush.msra.mxu0 %v64
  %188 = vmatpush.msra.mxu0 %v63
  %189 = vmatpush.msra.mxu0 %v62
  %190 = vmatpush.msra.mxu0 %v61
  %191 = vmatpush.msra.mxu0 %v60
  %192 = vmatpush.msra.mxu0 %v59
  %193 = vmatmul.f32.gmra.mxu0 %v175
  %v194 = vpop.f32.mrf.mxu0
  %v195 = vadd.f32 %v172, %v194
  %196 = vdwg.mxu0
  %v197 = vsub.f32 0.0, %v195
  %v198 = vmul.f32 %v197, 1.442695
  %v199 = vpow.pop %v198
  %v200 = vadd.f32 %v199, 1.0
  %v201 = vrcp.pop %v200
  %v202 = vmul.f32 %v200, %v201
  %v203 = vsub.f32 1.0, %v202
  %v204 = vmul.f32 %v201, %v203
  %v205 = vadd.f32 %v201, %v204
  %vm206 = vweird.f32 %v200
  %vm207 = vweird.f32 %v201
  %vm208 = vmor %vm206, %vm207
  %v209 = vsel %vm208, %v201, %v205
  %v210 = vand.u32 2147483647, %v200
  %vm211 = vcmp.eq.f32.partialorder %v210, 8.507059e+37
  %v212 = vand.u32 %v200, 2147483648
  %v213 = vor.u32 1.1754944e-38, %v212
  %v214 = vsel %vm211, %v213, %v209
  %v215 = vmul.f32 1.0, %v214
  %v216 = vmul.f32 %v215, 2.0
  %v217 = vsub.f32 %v216, 1.0
  %v218 = vmul.f32 %v215, %v12
  %220 = vrot.lane.b32.xlu0 %v217, 64
  %v221 = vpop.permute.xlu0 %220
  %v223 = vmul.f32 %v215, %v221
  %225 = vrot.lane.b32.xlu0 %v223, 32
  %v226 = vpop.permute.xlu0 %225
  %v228 = vadd.f32 %v218, %v226
  %v229 = vtanh.pop %v228
  %231 = vrot.lane.b32.xlu0 %v229, 64
  %v232 = vpop.permute.xlu0 %231
  %v234 = vmul.f32 %v215, %v232
  %236 = vrot.lane.b32.xlu0 %v234, 32
  %v237 = vpop.permute.xlu0 %236
  %v238 = vsel %vm170, %v237, 0
  %240 = vmatpush.msra.mxu0 0.0
  %241 = vmatpush.msra.mxu0 0.0
  %242 = vmatpush.msra.mxu0 0.0
  %243 = vmatpush.msra.mxu0 0.0
  %244 = vmatpush.msra.mxu0 0.0
  %245 = vmatpush.msra.mxu0 0.0
  %246 = vmatpush.msra.mxu0 0.0
  %247 = vmatpush.msra.mxu0 0.0
  %248 = vmatpush.msra.mxu0 0.0
  %249 = vmatpush.msra.mxu0 0.0
  %250 = vmatpush.msra.mxu0 0.0
  %251 = vmatpush.msra.mxu0 0.0
  %252 = vmatpush.msra.mxu0 %v74
  %253 = vmatpush.msra.mxu0 %v73
  %254 = vmatpush.msra.mxu0 %v72
  %255 = vmatpush.msra.mxu0 %v71
  %256 = vmatmul.f32.gmra.mxu0 %v238
  %v257 = vpop.f32.mrf.mxu0
  %v258 = vadd.f32 0.0, %v257
  %259 = vdwg.mxu0
  %260 = vmatpush.xpose.msra.mxu0 0.0
  %261 = vmatpush.xpose.msra.mxu0 0.0
  %262 = vmatpush.xpose.msra.mxu0 0.0
  %263 = vmatpush.xpose.msra.mxu0 0.0
  %264 = vmatpush.xpose.msra.mxu0 0.0
  %265 = vmatpush.xpose.msra.mxu0 0.0
  %266 = vmatpush.xpose.msra.mxu0 0.0
  %267 = vmatpush.xpose.msra.mxu0 0.0
  %268 = vmatpush.xpose.msra.mxu0 0.0
  %269 = vmatpush.xpose.msra.mxu0 0.0
  %270 = vmatpush.xpose.msra.mxu0 0.0
  %271 = vmatpush.xpose.msra.mxu0 0.0
  %272 = vmatpush.xpose.msra.mxu0 0.0
  %273 = vmatpush.xpose.msra.mxu0 0.0
  %274 = vmatpush.xpose.msra.mxu0 %v18
  %275 = vmatpush.xpose.msra.mxu0 %v17
  %276 = vmatmul.f32.gmra.mxu0 %v258
  %v277 = vpop.f32.mrf.mxu0
  %v278 = vadd.f32 0.0, %v277
  %279 = vdwg.mxu0
  %v280 = vlaneseq
  %v281 = vshrl.u32 %v280, 7
  %v282 = vlaneseq
  %v283 = vand.u32 %v282, 127
  %v284 = vmul.u32 %v281, 8
  %v285 = vsub.s32 %v283, %v284
  %vm286 = vcmp.ge.s32.totalorder %v285, 0
  %vm287 = vcmp.lt.s32.totalorder %v285, 8
  %vm288 = vmand %vm286, %vm287
  %v289 = vsel %vm288, %v278, -1e+30
  %vm290 = vcmask 123904
  %v291 = vsel %vm290, %v289, -inf
  %292 = vmax.xlane.f32.xlu0 %v291
  %v293 = vpop.xlane.xlu0 %292
  %v294 = vsub.f32 %v289, %v293
  %v295 = vmul.f32 %v294, 1.442695
  %v296 = vpow.pop %v295
  %v297 = vsel %vm290, %v296, 0.0
  %298 = vadd.xlane.f32.xlu0 %v297
  %v299 = vpop.xlane.xlu0 %298
  %v300 = vrcp.pop %v299
  %v301 = vmul.f32 %v296, %v300
  %vm302 = vcmask 130048
  %v304 = vsel %vm302, %v301, 0
  %306 = vmatpush.msra.mxu0 0.0
  %307 = vmatpush.msra.mxu0 0.0
  %308 = vmatpush.msra.mxu0 0.0
  %309 = vmatpush.msra.mxu0 0.0
  %310 = vmatpush.msra.mxu0 0.0
  %311 = vmatpush.msra.mxu0 0.0
  %312 = vmatpush.msra.mxu0 0.0
  %313 = vmatpush.msra.mxu0 0.0
  %314 = vmatpush.msra.mxu0 0.0
  %315 = vmatpush.msra.mxu0 0.0
  %316 = vmatpush.msra.mxu0 0.0
  %317 = vmatpush.msra.mxu0 0.0
  %318 = vmatpush.msra.mxu0 0.0
  %319 = vmatpush.msra.mxu0 0.0
  %320 = vmatpush.msra.mxu0 %v18
  %321 = vmatpush.msra.mxu0 %v17
  %322 = vmatmul.f32.gmra.mxu0 %v304
  %v323 = vpop.f32.mrf.mxu0
  %v324 = vadd.f32 0.0, %v323
  %325 = vdwg.mxu0
  %328 = vrot.lane.b32.xlu0 %v324, 32
  %v329 = vpop.permute.xlu0 %328
  %v331 = vsel %vm170, %v237, %v329
  %v333 = vsel %vm173, %v331, 0
  %335 = vmatpush.msra.mxu0 0.0
  %336 = vmatpush.msra.mxu0 0.0
  %337 = vmatpush.msra.mxu0 0.0
  %338 = vmatpush.msra.mxu0 0.0
  %339 = vmatpush.msra.mxu0 0.0
  %340 = vmatpush.msra.mxu0 0.0
  %341 = vmatpush.msra.mxu0 0.0
  %342 = vmatpush.msra.mxu0 0.0
  %343 = vmatpush.msra.mxu0 %v90
  %344 = vmatpush.msra.mxu0 %v89
  %345 = vmatpush.msra.mxu0 %v88
  %346 = vmatpush.msra.mxu0 %v87
  %347 = vmatpush.msra.mxu0 %v86
  %348 = vmatpush.msra.mxu0 %v85
  %349 = vmatpush.msra.mxu0 %v84
  %350 = vmatpush.msra.mxu0 %v83
  %351 = vmatmul.f32.gmra.mxu0 %v333
  %v352 = vpop.f32.mrf.mxu0
  %v353 = vadd.f32 0.0, %v352
  %354 = vdwg.mxu0
  %v355 = vperm.slane %v15, 0
  %v356 = vadd.f32 %v353, %v355
  %v357 = vtanh.pop %v356
  %v358 = vperm.slane %v16, 0
  %v360 = vsel %vm170, %v357, 0
  %362 = vmatpush.msra.mxu0 0.0
  %363 = vmatpush.msra.mxu0 0.0
  %364 = vmatpush.msra.mxu0 0.0
  %365 = vmatpush.msra.mxu0 0.0
  %366 = vmatpush.msra.mxu0 0.0
  %367 = vmatpush.msra.mxu0 0.0
  %368 = vmatpush.msra.mxu0 0.0
  %369 = vmatpush.msra.mxu0 0.0
  %370 = vmatpush.msra.mxu0 0.0
  %371 = vmatpush.msra.mxu0 0.0
  %372 = vmatpush.msra.mxu0 0.0
  %373 = vmatpush.msra.mxu0 0.0
  %374 = vmatpush.msra.mxu0 %v98
  %375 = vmatpush.msra.mxu0 %v97
  %376 = vmatpush.msra.mxu0 %v96
  %377 = vmatpush.msra.mxu0 %v95
  %378 = vmatmul.f32.gmra.mxu0 %v360
  %v379 = vpop.f32.mrf.mxu0
  %v380 = vadd.f32 %v358, %v379
  %381 = vdwg.mxu0
  %382 = vrot.lane.b32.xlu0 %v357, 64
  %v383 = vpop.permute.xlu0 %382
  %385 = vrot.lane.b32.xlu0 %v301, 96
  %v386 = vpop.permute.xlu0 %385
  %v388 = vsel %vm173, %v380, %v383
  %vm389 = vcmask 785408
  %v390 = vsel %vm389, %v388, %v386
  %vm391 = vcmask 916480
  %v392 = vsel %vm391, %v390, 0.0
  %393 = vrot.lane.b32.xlu0 %v234, 64
  %v394 = vpop.permute.xlu0 %393
  %397 = vrot.lane.b32.xlu0 %v155, 32
  %v398 = vpop.permute.xlu0 %397
  %401 = vrot.lane.b32.xlu0 %v228, 64
  %v402 = vpop.permute.xlu0 %401
  %v404 = vsel %vm170, %v164, %v394
  %v405 = vsel %vm173, %v404, %v398
  %v406 = vsel %vm389, %v405, %v402
  %v408 = vrot.slane %v406, 6
  %vm410 = vcmask 1041408
  %v411 = vsel %vm410, %v392, %v408
  %vm412 = vcmask 1043456
  %v413 = vsel %vm412, %v411, 0.0
  %414 = vst [vmem:[%s2] sm:$0xff] %v413
  // Predicated region
  $region10: #{lstm_attn_decoder_forward.1} parent=0 // pred_check
    _
  $region11: #{lstm_attn_decoder_forward.1} parent=0 // pred_check_branch
    %416 = sbr.rel (0) target = $region13
  $region12: #{lstm_attn_decoder_forward.1} parent=0 // pred_region
    _
  $region13: #{lstm_attn_decoder_forward.1} parent=0 // pred_fallthru
    _
  // Predicated region
  $region14: #{lstm_attn_decoder_forward.1} parent=0 // pred_check
    _
  $region15: #{lstm_attn_decoder_forward.1} parent=0 // pred_check_branch
    %418 = sbr.rel (0) target = $region17
  $region16: #{lstm_attn_decoder_forward.1} parent=0 // pred_region
    _
  $region17: #{lstm_attn_decoder_forward.1} parent=0 // pred_fallthru
    _

</llo_original>
